<compile_context>
chip_gen: v5e
topology: v5e:2x2
jax: 0.10.0
libtpu: 0.0.40
codegen_flags: <defaults>
</compile_context>

<pallas_src>
import functools

import jax
import jax.numpy as jnp
from jax import lax
from jax.experimental import pallas as pl
from jax.experimental.pallas import tpu as pltpu


def _round_up(n, m):
    return ((n + m - 1) // m) * m


def full_rank_rnn_forward(u, x0, noise, params, *, noise_std=0.05, tau=0.2, tb=8):
    """Pallas implementation of Full_Rank_RNN.forward (form='rate', mode='cont').

    Args:
      u:     (B, T, IN)  float32 inputs
      x0:    (B, H)      float32 initial hidden state
      noise: (T, B, H)   float32 pre-sampled Gaussian noise (torch.randn equiv.)
      params: (W_in (H, IN), b_in (H,), W_hh (H, H), W_out (OUT, H), b_out (OUT,))
      tb:    timesteps processed per grid step.

    Returns:
      (output (B, T, OUT), x_final (B, H), trajectories (B, T, H))
    """
    W_in, b_in, W_hh, W_out, b_out = params
    B, T, IN = u.shape
    H = W_hh.shape[0]

    f32 = jnp.float32
    u = u.astype(f32)
    x0 = x0.astype(f32)
    noise = noise.astype(f32)

    # ---- state-independent work, hoisted out of the kernel (plain JAX) ----
    # input_I for all timesteps at once, folded together with the noise term:
    #   drive[t] = noise_std * noise[t] + tau * (u_t @ W_in.T + b_in)
    inp_bth = jnp.einsum('bti,hi->bth', u, W_in.astype(f32)) + b_in.astype(f32)
    drive = noise_std * noise + tau * jnp.transpose(inp_bth, (1, 0, 2))  # (T, B, H)

    # ---- pad to TPU-native tiles: B -> 8 sublanes, H -> 128 lanes, T -> TB ----
    Bp = _round_up(B, 8)
    Hp = _round_up(H, 128)
    TB = min(tb, T)
    Tp = _round_up(T, TB)

    drive_p = jnp.zeros((Tp, Bp, Hp), f32).at[:T, :B, :H].set(drive)
    x0_p = jnp.zeros((Bp, Hp), f32).at[:B, :H].set(x0)
    whh_t_p = jnp.zeros((Hp, Hp), f32).at[:H, :H].set(W_hh.T.astype(f32))

    # ---- the hot path: sequential recurrence, hidden state resident in VMEM ----
    def kernel(x0_ref, whh_ref, drive_ref, traj_ref, x_state):
        @pl.when(pl.program_id(0) == 0)
        def _():
            x_state[...] = x0_ref[...]

        whh = whh_ref[...]                                       # (Hp, Hp), hoisted load

        def body(s, x):
            r = jnp.tanh(x)                                      # (Bp, Hp)
            hw = jnp.dot(r, whh, preferred_element_type=jnp.float32)
            x_new = x + drive_ref[s] + tau * (hw - x)
            traj_ref[s] = x_new                                  # lane-dense store
            return x_new

        x_state[...] = lax.fori_loop(0, TB, body, x_state[...], unroll=True)

    traj_p = pl.pallas_call(
        kernel,
        out_shape=jax.ShapeDtypeStruct((Tp, Bp, Hp), f32),
        grid_spec=pltpu.PrefetchScalarGridSpec(
            num_scalar_prefetch=0,
            grid=(Tp // TB,),
            in_specs=[
                pl.BlockSpec((Bp, Hp), lambda t: (0, 0)),        # x0 (constant block)
                pl.BlockSpec((Hp, Hp), lambda t: (0, 0)),        # W_hh.T (constant block)
                pl.BlockSpec((TB, Bp, Hp), lambda t: (t, 0, 0)), # drive slab
            ],
            out_specs=pl.BlockSpec((TB, Bp, Hp), lambda t: (t, 0, 0)),  # trajectories
            scratch_shapes=[pltpu.VMEM((Bp, Hp), f32)],          # hidden state
        ),
        compiler_params=pltpu.CompilerParams(
            dimension_semantics=("arbitrary",)),                 # sequential recurrence
    )(x0_p, whh_t_p, drive_p)

    # ---- strip padding, readout as one large matmul (plain JAX) ----
    traj_tbh = traj_p[:T, :B, :H]                                # (T, B, H)
    trajectories = jnp.transpose(traj_tbh, (1, 0, 2))            # (B, T, H)
    x_final = traj_tbh[T - 1]                                    # (B, H)
    output = jnp.tanh(trajectories) @ W_out.T.astype(f32) + b_out.astype(f32)
    return output, x_final, trajectories


def full_rank_rnn_reference(u, x0, noise, params, *, noise_std=0.05, tau=0.2):
    """Pure-JAX reference mirroring the PyTorch forward exactly."""
    W_in, b_in, W_hh, W_out, b_out = params

    def step(x, inp):
        u_t, n_t = inp
        r = jnp.tanh(x)
        input_i = u_t @ W_in.T + b_in
        hidden_w = r @ W_hh.T
        rec_x = hidden_w + input_i
        x_new = x + noise_std * n_t + tau * (-x + rec_x)
        return x_new, x_new

    x_final, traj = lax.scan(step, x0, (jnp.transpose(u, (1, 0, 2)), noise))
    traj_bt = jnp.transpose(traj, (1, 0, 2))
    output = jnp.tanh(traj_bt) @ W_out.T + b_out
    return output, x_final, traj_bt


if __name__ == "__main__":
    B, T, IN, H, OUT = 2, 8, 4, 32, 4          # w_out: hidden_dim -> input_size
    NOISE_STD, TAU = 0.05, 0.2

    key = jax.random.PRNGKey(0)
    ks = jax.random.split(key, 8)

    # Parameter init matching the shapes / init scales in __init__.
    W_hh = (0.1 / jnp.sqrt(H)) * jax.random.normal(ks[0], (H, H), jnp.float32)
    W_in = jax.random.normal(ks[1], (H, IN), jnp.float32)
    b_in = jnp.zeros((H,), jnp.float32)
    W_out = (1.0 / jnp.sqrt(H)) * jax.random.normal(ks[2], (OUT, H), jnp.float32)
    b_out = jax.random.uniform(ks[3], (OUT,), jnp.float32,
                               minval=-1.0 / jnp.sqrt(H), maxval=1.0 / jnp.sqrt(H))
    params = (W_in, b_in, W_hh, W_out, b_out)

    # Inputs; noise (torch.randn in forward) is pre-sampled and fed in.
    u = jax.random.normal(ks[4], (B, T, IN), jnp.float32)
    x0 = 0.1 * jax.random.normal(ks[5], (B, H), jnp.float32)
    noise = jax.random.normal(ks[6], (T, B, H), jnp.float32)

    fwd = jax.jit(functools.partial(full_rank_rnn_forward,
                                    noise_std=NOISE_STD, tau=TAU))
    out, x_fin, traj = fwd(u, x0, noise, params)
    jax.block_until_ready((out, x_fin, traj))

    out_r, x_fin_r, traj_r = full_rank_rnn_reference(u, x0, noise, params,
                                                     noise_std=NOISE_STD, tau=TAU)

    assert jnp.allclose(traj, traj_r, atol=1e-4, rtol=1e-4), "trajectories mismatch"
    assert jnp.allclose(x_fin, x_fin_r, atol=1e-4, rtol=1e-4), "final state mismatch"
    assert jnp.allclose(out, out_r, atol=1e-3, rtol=1e-3), "output mismatch"

    print("KERNEL_OK")
</pallas_src>

<mosaic_0001>
module attributes {stable_mosaic.version = 11 : i64} {
  func.func @kernel(%arg0: i32, %arg1: memref<8x128xf32, #tpu.memory_space<vmem>>, %arg2: memref<128x128xf32, #tpu.memory_space<vmem>>, %arg3: memref<8x8x128xf32, #tpu.memory_space<vmem>>, %arg4: memref<8x8x128xf32, #tpu.memory_space<vmem>>, %arg5: memref<8x128xf32, #tpu.memory_space<vmem>>) attributes {dimension_semantics = [#tpu.dimension_semantics<arbitrary>], iteration_bounds = array<i64: 1>, scalar_prefetch = 0 : i64, scratch_operands = 1 : i64, tpu.core_type = #tpu.core_type<tc>, window_params = [{pipeline_mode = #tpu.pipeline_mode<synchronous>, transform_indices = @transform_0, window_bounds = array<i64: 8, 128>}, {pipeline_mode = #tpu.pipeline_mode<synchronous>, transform_indices = @transform_1, window_bounds = array<i64: 128, 128>}, {transform_indices = @transform_2, window_bounds = array<i64: 8, 8, 128>}, {transform_indices = @transform_3, window_bounds = array<i64: 8, 8, 128>}]} {
    %c0_i32 = arith.constant 0 : i32
    %0 = arith.cmpi eq, %arg0, %c0_i32 : i32
    %1 = arith.extui %0 : i1 to i32
    %c0_i32_0 = arith.constant 0 : i32
    %2 = arith.cmpi ne, %1, %c0_i32_0 : i32
    scf.if %2 {
      %c0_54 = arith.constant 0 : index
      %c0_55 = arith.constant 0 : index
      %118 = vector.load %arg1[%c0_54, %c0_55] : memref<8x128xf32, #tpu.memory_space<vmem>>, vector<8x128xf32>
      %c0_56 = arith.constant 0 : index
      %c0_57 = arith.constant 0 : index
      %119 = vector.load %arg5[%c0_56, %c0_57] : memref<8x128xf32, #tpu.memory_space<vmem>>, vector<8x128xf32>
      tpu.vector_store %arg5[%c0_56, %c0_57], %118 {strides = array<i32>} : memref<8x128xf32, #tpu.memory_space<vmem>>, vector<8x128xf32>,
    } else {
    }
    %c0 = arith.constant 0 : index
    %c0_1 = arith.constant 0 : index
    %3 = vector.load %arg2[%c0, %c0_1] : memref<128x128xf32, #tpu.memory_space<vmem>>, vector<128x128xf32>
    %c0_2 = arith.constant 0 : index
    %c0_3 = arith.constant 0 : index
    %4 = vector.load %arg5[%c0_2, %c0_3] : memref<8x128xf32, #tpu.memory_space<vmem>>, vector<8x128xf32>
    %c0_i32_4 = arith.constant 0 : i32
    %5 = math.tanh %4 : vector<8x128xf32>
    %cst = arith.constant dense<0.000000e+00> : vector<8x128xf32>
    %6 = tpu.matmul %5, %3, %cst {dimension_numbers = #tpu.dot_dimension_numbers<[1], [0], [0], [1], [0, 0, 1, 1], [], []>} : vector<8x128xf32>, vector<128x128xf32>, vector<8x128xf32> -> vector<8x128xf32>
    %7 = arith.index_cast %c0_i32_4 : i32 to index
    %c0_5 = arith.constant 0 : index
    %c0_6 = arith.constant 0 : index
    %8 = vector.load %arg3[%7, %c0_5, %c0_6] : memref<8x8x128xf32, #tpu.memory_space<vmem>>, vector<1x8x128xf32>
    %9 = vector.shape_cast %8 : vector<1x8x128xf32> to vector<8x128xf32>
    %10 = arith.addf %4, %9 : vector<8x128xf32>
    %11 = arith.subf %6, %4 : vector<8x128xf32>
    %cst_7 = arith.constant 2.000000e-01 : f32
    %12 = vector.broadcast %cst_7 : f32 to vector<8x128xf32>
    %13 = arith.mulf %12, %11 : vector<8x128xf32>
    %14 = arith.addf %10, %13 : vector<8x128xf32>
    %15 = arith.index_cast %c0_i32_4 : i32 to index
    %c0_8 = arith.constant 0 : index
    %c0_9 = arith.constant 0 : index
    %16 = vector.load %arg4[%15, %c0_8, %c0_9] : memref<8x8x128xf32, #tpu.memory_space<vmem>>, vector<1x8x128xf32>
    %17 = vector.shape_cast %16 : vector<1x8x128xf32> to vector<8x128xf32>
    %18 = vector.shape_cast %14 : vector<8x128xf32> to vector<1x8x128xf32>
    tpu.vector_store %arg4[%15, %c0_8, %c0_9], %18 {strides = array<i32>} : memref<8x8x128xf32, #tpu.memory_space<vmem>>, vector<1x8x128xf32>,
    %c1_i32 = arith.constant 1 : i32
    %19 = math.tanh %14 : vector<8x128xf32>
    %cst_10 = arith.constant dense<0.000000e+00> : vector<8x128xf32>
    %20 = tpu.matmul %19, %3, %cst_10 {dimension_numbers = #tpu.dot_dimension_numbers<[1], [0], [0], [1], [0, 0, 1, 1], [], []>} : vector<8x128xf32>, vector<128x128xf32>, vector<8x128xf32> -> vector<8x128xf32>
    %21 = arith.index_cast %c1_i32 : i32 to index
    %c0_11 = arith.constant 0 : index
    %c0_12 = arith.constant 0 : index
    %22 = vector.load %arg3[%21, %c0_11, %c0_12] : memref<8x8x128xf32, #tpu.memory_space<vmem>>, vector<1x8x128xf32>
    %23 = vector.shape_cast %22 : vector<1x8x128xf32> to vector<8x128xf32>
    %24 = arith.addf %14, %23 : vector<8x128xf32>
    %25 = arith.subf %20, %14 : vector<8x128xf32>
    %cst_13 = arith.constant 2.000000e-01 : f32
    %26 = vector.broadcast %cst_13 : f32 to vector<8x128xf32>
    %27 = arith.mulf %26, %25 : vector<8x128xf32>
    %28 = arith.addf %24, %27 : vector<8x128xf32>
    %29 = arith.index_cast %c1_i32 : i32 to index
    %c0_14 = arith.constant 0 : index
    %c0_15 = arith.constant 0 : index
    %30 = vector.load %arg4[%29, %c0_14, %c0_15] : memref<8x8x128xf32, #tpu.memory_space<vmem>>, vector<1x8x128xf32>
    %31 = vector.shape_cast %30 : vector<1x8x128xf32> to vector<8x128xf32>
    %32 = vector.shape_cast %28 : vector<8x128xf32> to vector<1x8x128xf32>
    tpu.vector_store %arg4[%29, %c0_14, %c0_15], %32 {strides = array<i32>} : memref<8x8x128xf32, #tpu.memory_space<vmem>>, vector<1x8x128xf32>,
    %c2_i32 = arith.constant 2 : i32
    %33 = math.tanh %28 : vector<8x128xf32>
    %cst_16 = arith.constant dense<0.000000e+00> : vector<8x128xf32>
    %34 = tpu.matmul %33, %3, %cst_16 {dimension_numbers = #tpu.dot_dimension_numbers<[1], [0], [0], [1], [0, 0, 1, 1], [], []>} : vector<8x128xf32>, vector<128x128xf32>, vector<8x128xf32> -> vector<8x128xf32>
    %35 = arith.index_cast %c2_i32 : i32 to index
    %c0_17 = arith.constant 0 : index
    %c0_18 = arith.constant 0 : index
    %36 = vector.load %arg3[%35, %c0_17, %c0_18] : memref<8x8x128xf32, #tpu.memory_space<vmem>>, vector<1x8x128xf32>
    %37 = vector.shape_cast %36 : vector<1x8x128xf32> to vector<8x128xf32>
    %38 = arith.addf %28, %37 : vector<8x128xf32>
    %39 = arith.subf %34, %28 : vector<8x128xf32>
    %cst_19 = arith.constant 2.000000e-01 : f32
    %40 = vector.broadcast %cst_19 : f32 to vector<8x128xf32>
    %41 = arith.mulf %40, %39 : vector<8x128xf32>
    %42 = arith.addf %38, %41 : vector<8x128xf32>
    %43 = arith.index_cast %c2_i32 : i32 to index
    %c0_20 = arith.constant 0 : index
    %c0_21 = arith.constant 0 : index
    %44 = vector.load %arg4[%43, %c0_20, %c0_21] : memref<8x8x128xf32, #tpu.memory_space<vmem>>, vector<1x8x128xf32>
    %45 = vector.shape_cast %44 : vector<1x8x128xf32> to vector<8x128xf32>
    %46 = vector.shape_cast %42 : vector<8x128xf32> to vector<1x8x128xf32>
    tpu.vector_store %arg4[%43, %c0_20, %c0_21], %46 {strides = array<i32>} : memref<8x8x128xf32, #tpu.memory_space<vmem>>, vector<1x8x128xf32>,
    %c3_i32 = arith.constant 3 : i32
    %47 = math.tanh %42 : vector<8x128xf32>
    %cst_22 = arith.constant dense<0.000000e+00> : vector<8x128xf32>
    %48 = tpu.matmul %47, %3, %cst_22 {dimension_numbers = #tpu.dot_dimension_numbers<[1], [0], [0], [1], [0, 0, 1, 1], [], []>} : vector<8x128xf32>, vector<128x128xf32>, vector<8x128xf32> -> vector<8x128xf32>
    %49 = arith.index_cast %c3_i32 : i32 to index
    %c0_23 = arith.constant 0 : index
    %c0_24 = arith.constant 0 : index
    %50 = vector.load %arg3[%49, %c0_23, %c0_24] : memref<8x8x128xf32, #tpu.memory_space<vmem>>, vector<1x8x128xf32>
    %51 = vector.shape_cast %50 : vector<1x8x128xf32> to vector<8x128xf32>
    %52 = arith.addf %42, %51 : vector<8x128xf32>
    %53 = arith.subf %48, %42 : vector<8x128xf32>
    %cst_25 = arith.constant 2.000000e-01 : f32
    %54 = vector.broadcast %cst_25 : f32 to vector<8x128xf32>
    %55 = arith.mulf %54, %53 : vector<8x128xf32>
    %56 = arith.addf %52, %55 : vector<8x128xf32>
    %57 = arith.index_cast %c3_i32 : i32 to index
    %c0_26 = arith.constant 0 : index
    %c0_27 = arith.constant 0 : index
    %58 = vector.load %arg4[%57, %c0_26, %c0_27] : memref<8x8x128xf32, #tpu.memory_space<vmem>>, vector<1x8x128xf32>
    %59 = vector.shape_cast %58 : vector<1x8x128xf32> to vector<8x128xf32>
    %60 = vector.shape_cast %56 : vector<8x128xf32> to vector<1x8x128xf32>
    tpu.vector_store %arg4[%57, %c0_26, %c0_27], %60 {strides = array<i32>} : memref<8x8x128xf32, #tpu.memory_space<vmem>>, vector<1x8x128xf32>,
    %c4_i32 = arith.constant 4 : i32
    %61 = math.tanh %56 : vector<8x128xf32>
    %cst_28 = arith.constant dense<0.000000e+00> : vector<8x128xf32>
    %62 = tpu.matmul %61, %3, %cst_28 {dimension_numbers = #tpu.dot_dimension_numbers<[1], [0], [0], [1], [0, 0, 1, 1], [], []>} : vector<8x128xf32>, vector<128x128xf32>, vector<8x128xf32> -> vector<8x128xf32>
    %63 = arith.index_cast %c4_i32 : i32 to index
    %c0_29 = arith.constant 0 : index
    %c0_30 = arith.constant 0 : index
    %64 = vector.load %arg3[%63, %c0_29, %c0_30] : memref<8x8x128xf32, #tpu.memory_space<vmem>>, vector<1x8x128xf32>
    %65 = vector.shape_cast %64 : vector<1x8x128xf32> to vector<8x128xf32>
    %66 = arith.addf %56, %65 : vector<8x128xf32>
    %67 = arith.subf %62, %56 : vector<8x128xf32>
    %cst_31 = arith.constant 2.000000e-01 : f32
    %68 = vector.broadcast %cst_31 : f32 to vector<8x128xf32>
    %69 = arith.mulf %68, %67 : vector<8x128xf32>
    %70 = arith.addf %66, %69 : vector<8x128xf32>
    %71 = arith.index_cast %c4_i32 : i32 to index
    %c0_32 = arith.constant 0 : index
    %c0_33 = arith.constant 0 : index
    %72 = vector.load %arg4[%71, %c0_32, %c0_33] : memref<8x8x128xf32, #tpu.memory_space<vmem>>, vector<1x8x128xf32>
    %73 = vector.shape_cast %72 : vector<1x8x128xf32> to vector<8x128xf32>
    %74 = vector.shape_cast %70 : vector<8x128xf32> to vector<1x8x128xf32>
    tpu.vector_store %arg4[%71, %c0_32, %c0_33], %74 {strides = array<i32>} : memref<8x8x128xf32, #tpu.memory_space<vmem>>, vector<1x8x128xf32>,
    %c5_i32 = arith.constant 5 : i32
    %75 = math.tanh %70 : vector<8x128xf32>
    %cst_34 = arith.constant dense<0.000000e+00> : vector<8x128xf32>
    %76 = tpu.matmul %75, %3, %cst_34 {dimension_numbers = #tpu.dot_dimension_numbers<[1], [0], [0], [1], [0, 0, 1, 1], [], []>} : vector<8x128xf32>, vector<128x128xf32>, vector<8x128xf32> -> vector<8x128xf32>
    %77 = arith.index_cast %c5_i32 : i32 to index
    %c0_35 = arith.constant 0 : index
    %c0_36 = arith.constant 0 : index
    %78 = vector.load %arg3[%77, %c0_35, %c0_36] : memref<8x8x128xf32, #tpu.memory_space<vmem>>, vector<1x8x128xf32>
    %79 = vector.shape_cast %78 : vector<1x8x128xf32> to vector<8x128xf32>
    %80 = arith.addf %70, %79 : vector<8x128xf32>
    %81 = arith.subf %76, %70 : vector<8x128xf32>
    %cst_37 = arith.constant 2.000000e-01 : f32
    %82 = vector.broadcast %cst_37 : f32 to vector<8x128xf32>
    %83 = arith.mulf %82, %81 : vector<8x128xf32>
    %84 = arith.addf %80, %83 : vector<8x128xf32>
    %85 = arith.index_cast %c5_i32 : i32 to index
    %c0_38 = arith.constant 0 : index
    %c0_39 = arith.constant 0 : index
    %86 = vector.load %arg4[%85, %c0_38, %c0_39] : memref<8x8x128xf32, #tpu.memory_space<vmem>>, vector<1x8x128xf32>
    %87 = vector.shape_cast %86 : vector<1x8x128xf32> to vector<8x128xf32>
    %88 = vector.shape_cast %84 : vector<8x128xf32> to vector<1x8x128xf32>
    tpu.vector_store %arg4[%85, %c0_38, %c0_39], %88 {strides = array<i32>} : memref<8x8x128xf32, #tpu.memory_space<vmem>>, vector<1x8x128xf32>,
    %c6_i32 = arith.constant 6 : i32
    %89 = math.tanh %84 : vector<8x128xf32>
    %cst_40 = arith.constant dense<0.000000e+00> : vector<8x128xf32>
    %90 = tpu.matmul %89, %3, %cst_40 {dimension_numbers = #tpu.dot_dimension_numbers<[1], [0], [0], [1], [0, 0, 1, 1], [], []>} : vector<8x128xf32>, vector<128x128xf32>, vector<8x128xf32> -> vector<8x128xf32>
    %91 = arith.index_cast %c6_i32 : i32 to index
    %c0_41 = arith.constant 0 : index
    %c0_42 = arith.constant 0 : index
    %92 = vector.load %arg3[%91, %c0_41, %c0_42] : memref<8x8x128xf32, #tpu.memory_space<vmem>>, vector<1x8x128xf32>
    %93 = vector.shape_cast %92 : vector<1x8x128xf32> to vector<8x128xf32>
    %94 = arith.addf %84, %93 : vector<8x128xf32>
    %95 = arith.subf %90, %84 : vector<8x128xf32>
    %cst_43 = arith.constant 2.000000e-01 : f32
    %96 = vector.broadcast %cst_43 : f32 to vector<8x128xf32>
    %97 = arith.mulf %96, %95 : vector<8x128xf32>
    %98 = arith.addf %94, %97 : vector<8x128xf32>
    %99 = arith.index_cast %c6_i32 : i32 to index
    %c0_44 = arith.constant 0 : index
    %c0_45 = arith.constant 0 : index
    %100 = vector.load %arg4[%99, %c0_44, %c0_45] : memref<8x8x128xf32, #tpu.memory_space<vmem>>, vector<1x8x128xf32>
    %101 = vector.shape_cast %100 : vector<1x8x128xf32> to vector<8x128xf32>
    %102 = vector.shape_cast %98 : vector<8x128xf32> to vector<1x8x128xf32>
    tpu.vector_store %arg4[%99, %c0_44, %c0_45], %102 {strides = array<i32>} : memref<8x8x128xf32, #tpu.memory_space<vmem>>, vector<1x8x128xf32>,
    %c7_i32 = arith.constant 7 : i32
    %103 = math.tanh %98 : vector<8x128xf32>
    %cst_46 = arith.constant dense<0.000000e+00> : vector<8x128xf32>
    %104 = tpu.matmul %103, %3, %cst_46 {dimension_numbers = #tpu.dot_dimension_numbers<[1], [0], [0], [1], [0, 0, 1, 1], [], []>} : vector<8x128xf32>, vector<128x128xf32>, vector<8x128xf32> -> vector<8x128xf32>
    %105 = arith.index_cast %c7_i32 : i32 to index
    %c0_47 = arith.constant 0 : index
    %c0_48 = arith.constant 0 : index
    %106 = vector.load %arg3[%105, %c0_47, %c0_48] : memref<8x8x128xf32, #tpu.memory_space<vmem>>, vector<1x8x128xf32>
    %107 = vector.shape_cast %106 : vector<1x8x128xf32> to vector<8x128xf32>
    %108 = arith.addf %98, %107 : vector<8x128xf32>
    %109 = arith.subf %104, %98 : vector<8x128xf32>
    %cst_49 = arith.constant 2.000000e-01 : f32
    %110 = vector.broadcast %cst_49 : f32 to vector<8x128xf32>
    %111 = arith.mulf %110, %109 : vector<8x128xf32>
    %112 = arith.addf %108, %111 : vector<8x128xf32>
    %113 = arith.index_cast %c7_i32 : i32 to index
    %c0_50 = arith.constant 0 : index
    %c0_51 = arith.constant 0 : index
    %114 = vector.load %arg4[%113, %c0_50, %c0_51] : memref<8x8x128xf32, #tpu.memory_space<vmem>>, vector<1x8x128xf32>
    %115 = vector.shape_cast %114 : vector<1x8x128xf32> to vector<8x128xf32>
    %116 = vector.shape_cast %112 : vector<8x128xf32> to vector<1x8x128xf32>
    tpu.vector_store %arg4[%113, %c0_50, %c0_51], %116 {strides = array<i32>} : memref<8x8x128xf32, #tpu.memory_space<vmem>>, vector<1x8x128xf32>,
    %c8_i32 = arith.constant 8 : i32
    %c0_52 = arith.constant 0 : index
    %c0_53 = arith.constant 0 : index
    %117 = vector.load %arg5[%c0_52, %c0_53] : memref<8x128xf32, #tpu.memory_space<vmem>>, vector<8x128xf32>
    tpu.vector_store %arg5[%c0_52, %c0_53], %112 {strides = array<i32>} : memref<8x128xf32, #tpu.memory_space<vmem>>, vector<8x128xf32>,
    return
  }
  func.func @transform_0(%arg0: i32) -> (i32, i32) {
    %c0_i32 = arith.constant 0 : i32
    %c0_i32_0 = arith.constant 0 : i32
    %c0_i32_1 = arith.constant 0 : i32
    return %c0_i32, %c0_i32_0 : i32, i32
  }
  func.func @transform_1(%arg0: i32) -> (i32, i32) {
    %c0_i32 = arith.constant 0 : i32
    %c0_i32_0 = arith.constant 0 : i32
    %c0_i32_1 = arith.constant 0 : i32
    return %c0_i32, %c0_i32_0 : i32, i32
  }
  func.func @transform_2(%arg0: i32) -> (i32, i32, i32) {
    %c0_i32 = arith.constant 0 : i32
    %c0_i32_0 = arith.constant 0 : i32
    %c0_i32_1 = arith.constant 0 : i32
    return %arg0, %c0_i32, %c0_i32_0 : i32, i32, i32
  }
  func.func @transform_3(%arg0: i32) -> (i32, i32, i32) {
    %c0_i32 = arith.constant 0 : i32
    %c0_i32_0 = arith.constant 0 : i32
    %c0_i32_1 = arith.constant 0 : i32
    return %arg0, %c0_i32, %c0_i32_0 : i32, i32, i32
  }
}

</mosaic_0001>

<llo_original>
// kernel: full_rank_rnn_forward.1
$region0: #{full_rank_rnn_forward.1}
  #allocation0 [shape = 'u32[]', space=smem, size = 0x4, offset = 0x4, fixed_abs, tag = 'smem constant byte address 0x4 - core index']
  #allocation1 [shape = 'u32[72,128]{1,0:T(1,128)}', space=vmem, size = 0x9000, scoped, tag = 'internal scratch']
  #allocation2 [shape = 'f32[8,128]{1,0:T(8,128)}', space=vmem, size = 0x1000, scoped, tag = 'scratch operand']
  %s0 = inlined_call_operand.vmem [shape: f32[8,128], index: 0, kind: input, shape index: {}]
  %s1 = inlined_call_operand.vmem [shape: f32[128,128], index: 1, kind: input, shape index: {}]
  %s2 = inlined_call_operand.vmem [shape: f32[8,8,128], index: 2, kind: input, shape index: {}]
  %s3 = inlined_call_operand.vmem [shape: f32[8,8,128], index: 3, kind: output, shape index: {}]
  %s4 = sld [smem:[#allocation0]]
  $region26: #{full_rank_rnn_forward.1} parent=0
    _
  %s6 = ssub.s32 1, %s4
  %s7 = scalar_select 0, %s6, %s4
  // Predicated region
  $region2: #{full_rank_rnn_forward.1} parent=0 // pred_check
    _
  $region3: #{full_rank_rnn_forward.1} parent=0 // pred_check_branch
    %9 = sbr.rel (0) target = $region5
  $region4: #{full_rank_rnn_forward.1} parent=0 // pred_region
    _
  $region5: #{full_rank_rnn_forward.1} parent=0 // pred_fallthru
    _
  // Predicated region
  $region6: #{full_rank_rnn_forward.1} parent=0 // pred_check
    _
  $region7: #{full_rank_rnn_forward.1} parent=0 // pred_check_branch
    %11 = sbr.rel (0) target = $region9
  $region8: #{full_rank_rnn_forward.1} parent=0 // pred_region
    _
  $region9: #{full_rank_rnn_forward.1} parent=0 // pred_fallthru
    _
  // Predicated region
  $region10: #{full_rank_rnn_forward.1} parent=0 // pred_check
    _
  $region11: #{full_rank_rnn_forward.1} parent=0 // pred_check_branch
    %13 = sbr.rel (0) target = $region13
  $region12: #{full_rank_rnn_forward.1} parent=0 // pred_region
    _
  $region13: #{full_rank_rnn_forward.1} parent=0 // pred_fallthru
    _
  %p14 = scmp.eq.s32.totalorder 0, 0
  // Predicated region
  $region14: #{full_rank_rnn_forward.1} parent=0 // pred_check
    %p15 = pneg %p14
  $region15: #{full_rank_rnn_forward.1} parent=0 // pred_check_branch
    %17 = sbr.rel (%p15) target = $region17
  $region16: #{full_rank_rnn_forward.1} parent=0 // pred_region
    %v18 = vld [vmem:[%s0] sm:$0xff]
    %19 = vst [vmem:[#allocation2] sm:$0xff] %v18
  $region17: #{full_rank_rnn_forward.1} parent=0 // pred_fallthru
    _
  %v20 = vld [vmem:[%s1] sm:$0xff]
  %v21 = vld [vmem:[%s1 + $0x8] sm:$0xff]
  %v22 = vld [vmem:[%s1 + $0x10] sm:$0xff]
  %v23 = vld [vmem:[%s1 + $0x18] sm:$0xff]
  %v24 = vld [vmem:[%s1 + $0x20] sm:$0xff]
  %v25 = vld [vmem:[%s1 + $0x28] sm:$0xff]
  %v26 = vld [vmem:[%s1 + $0x30] sm:$0xff]
  %v27 = vld [vmem:[%s1 + $0x38] sm:$0xff]
  %v28 = vld [vmem:[%s1 + $0x40] sm:$0xff]
  %v29 = vld [vmem:[%s1 + $0x48] sm:$0xff]
  %v30 = vld [vmem:[%s1 + $0x50] sm:$0xff]
  %v31 = vld [vmem:[%s1 + $0x58] sm:$0xff]
  %v32 = vld [vmem:[%s1 + $0x60] sm:$0xff]
  %v33 = vld [vmem:[%s1 + $0x68] sm:$0xff]
  %v34 = vld [vmem:[%s1 + $0x70] sm:$0xff]
  %v35 = vld [vmem:[%s1 + $0x78] sm:$0xff]
  %v36 = vld [vmem:[#allocation2] sm:$0xff]
  %v37 = vtanh.pop %v36
  %38 = vmatpush.msra.mxu0 %v35
  %39 = vmatpush.msra.mxu0 %v34
  %40 = vmatpush.msra.mxu0 %v33
  %41 = vmatpush.msra.mxu0 %v32
  %42 = vmatpush.msra.mxu0 %v31
  %43 = vmatpush.msra.mxu0 %v30
  %44 = vmatpush.msra.mxu0 %v29
  %45 = vmatpush.msra.mxu0 %v28
  %46 = vmatpush.msra.mxu0 %v27
  %47 = vmatpush.msra.mxu0 %v26
  %48 = vmatpush.msra.mxu0 %v25
  %49 = vmatpush.msra.mxu0 %v24
  %50 = vmatpush.msra.mxu0 %v23
  %51 = vmatpush.msra.mxu0 %v22
  %52 = vmatpush.msra.mxu0 %v21
  %53 = vmatpush.msra.mxu0 %v20
  %54 = vmatmul.f32.gmra.mxu0 %v37
  %v55 = vpop.f32.mrf.mxu0
  %v56 = vadd.f32 0.0, %v55
  %57 = vdwg.mxu0
  %v58 = vld [vmem:[%s2] sm:$0xff]
  %v59 = vadd.f32 %v36, %v58
  %v60 = vsub.f32 %v56, %v36
  %v61 = vmul.f32 %v60, 0.2
  %v62 = vadd.f32 %v59, %v61
  %63 = vst [vmem:[%s3] sm:$0xff] %v62
  %v64 = vtanh.pop %v62
  %65 = vmatpush.msra.mxu0 %v35
  %66 = vmatpush.msra.mxu0 %v34
  %67 = vmatpush.msra.mxu0 %v33
  %68 = vmatpush.msra.mxu0 %v32
  %69 = vmatpush.msra.mxu0 %v31
  %70 = vmatpush.msra.mxu0 %v30
  %71 = vmatpush.msra.mxu0 %v29
  %72 = vmatpush.msra.mxu0 %v28
  %73 = vmatpush.msra.mxu0 %v27
  %74 = vmatpush.msra.mxu0 %v26
  %75 = vmatpush.msra.mxu0 %v25
  %76 = vmatpush.msra.mxu0 %v24
  %77 = vmatpush.msra.mxu0 %v23
  %78 = vmatpush.msra.mxu0 %v22
  %79 = vmatpush.msra.mxu0 %v21
  %80 = vmatpush.msra.mxu0 %v20
  %81 = vmatmul.f32.gmra.mxu0 %v64
  %v82 = vpop.f32.mrf.mxu0
  %v83 = vadd.f32 0.0, %v82
  %84 = vdwg.mxu0
  %s85 = scalar_lea.vmem %s2, 8
  %v86 = vld [vmem:[%s85] sm:$0xff]
  %v87 = vadd.f32 %v62, %v86
  %v88 = vsub.f32 %v83, %v62
  %v89 = vmul.f32 %v88, 0.2
  %v90 = vadd.f32 %v87, %v89
  %s91 = scalar_lea.vmem %s3, 8
  %92 = vst [vmem:[%s91] sm:$0xff] %v90
  %v93 = vtanh.pop %v90
  %94 = vmatpush.msra.mxu0 %v35
  %95 = vmatpush.msra.mxu0 %v34
  %96 = vmatpush.msra.mxu0 %v33
  %97 = vmatpush.msra.mxu0 %v32
  %98 = vmatpush.msra.mxu0 %v31
  %99 = vmatpush.msra.mxu0 %v30
  %100 = vmatpush.msra.mxu0 %v29
  %101 = vmatpush.msra.mxu0 %v28
  %102 = vmatpush.msra.mxu0 %v27
  %103 = vmatpush.msra.mxu0 %v26
  %104 = vmatpush.msra.mxu0 %v25
  %105 = vmatpush.msra.mxu0 %v24
  %106 = vmatpush.msra.mxu0 %v23
  %107 = vmatpush.msra.mxu0 %v22
  %108 = vmatpush.msra.mxu0 %v21
  %109 = vmatpush.msra.mxu0 %v20
  %110 = vmatmul.f32.gmra.mxu0 %v93
  %v111 = vpop.f32.mrf.mxu0
  %v112 = vadd.f32 0.0, %v111
  %113 = vdwg.mxu0
  %s114 = scalar_lea.vmem %s2, 16
  %v115 = vld [vmem:[%s114] sm:$0xff]
  %v116 = vadd.f32 %v90, %v115
  %v117 = vsub.f32 %v112, %v90
  %v118 = vmul.f32 %v117, 0.2
  %v119 = vadd.f32 %v116, %v118
  %s120 = scalar_lea.vmem %s3, 16
  %121 = vst [vmem:[%s120] sm:$0xff] %v119
  %v122 = vtanh.pop %v119
  %123 = vmatpush.msra.mxu0 %v35
  %124 = vmatpush.msra.mxu0 %v34
  %125 = vmatpush.msra.mxu0 %v33
  %126 = vmatpush.msra.mxu0 %v32
  %127 = vmatpush.msra.mxu0 %v31
  %128 = vmatpush.msra.mxu0 %v30
  %129 = vmatpush.msra.mxu0 %v29
  %130 = vmatpush.msra.mxu0 %v28
  %131 = vmatpush.msra.mxu0 %v27
  %132 = vmatpush.msra.mxu0 %v26
  %133 = vmatpush.msra.mxu0 %v25
  %134 = vmatpush.msra.mxu0 %v24
  %135 = vmatpush.msra.mxu0 %v23
  %136 = vmatpush.msra.mxu0 %v22
  %137 = vmatpush.msra.mxu0 %v21
  %138 = vmatpush.msra.mxu0 %v20
  %139 = vmatmul.f32.gmra.mxu0 %v122
  %v140 = vpop.f32.mrf.mxu0
  %v141 = vadd.f32 0.0, %v140
  %142 = vdwg.mxu0
  %s143 = scalar_lea.vmem %s2, 24
  %v144 = vld [vmem:[%s143] sm:$0xff]
  %v145 = vadd.f32 %v119, %v144
  %v146 = vsub.f32 %v141, %v119
  %v147 = vmul.f32 %v146, 0.2
  %v148 = vadd.f32 %v145, %v147
  %s149 = scalar_lea.vmem %s3, 24
  %150 = vst [vmem:[%s149] sm:$0xff] %v148
  %v151 = vtanh.pop %v148
  %152 = vmatpush.msra.mxu0 %v35
  %153 = vmatpush.msra.mxu0 %v34
  %154 = vmatpush.msra.mxu0 %v33
  %155 = vmatpush.msra.mxu0 %v32
  %156 = vmatpush.msra.mxu0 %v31
  %157 = vmatpush.msra.mxu0 %v30
  %158 = vmatpush.msra.mxu0 %v29
  %159 = vmatpush.msra.mxu0 %v28
  %160 = vmatpush.msra.mxu0 %v27
  %161 = vmatpush.msra.mxu0 %v26
  %162 = vmatpush.msra.mxu0 %v25
  %163 = vmatpush.msra.mxu0 %v24
  %164 = vmatpush.msra.mxu0 %v23
  %165 = vmatpush.msra.mxu0 %v22
  %166 = vmatpush.msra.mxu0 %v21
  %167 = vmatpush.msra.mxu0 %v20
  %168 = vmatmul.f32.gmra.mxu0 %v151
  %v169 = vpop.f32.mrf.mxu0
  %v170 = vadd.f32 0.0, %v169
  %171 = vdwg.mxu0
  %s172 = scalar_lea.vmem %s2, 32
  %v173 = vld [vmem:[%s172] sm:$0xff]
  %v174 = vadd.f32 %v148, %v173
  %v175 = vsub.f32 %v170, %v148
  %v176 = vmul.f32 %v175, 0.2
  %v177 = vadd.f32 %v174, %v176
  %s178 = scalar_lea.vmem %s3, 32
  %179 = vst [vmem:[%s178] sm:$0xff] %v177
  %v180 = vtanh.pop %v177
  %181 = vmatpush.msra.mxu0 %v35
  %182 = vmatpush.msra.mxu0 %v34
  %183 = vmatpush.msra.mxu0 %v33
  %184 = vmatpush.msra.mxu0 %v32
  %185 = vmatpush.msra.mxu0 %v31
  %186 = vmatpush.msra.mxu0 %v30
  %187 = vmatpush.msra.mxu0 %v29
  %188 = vmatpush.msra.mxu0 %v28
  %189 = vmatpush.msra.mxu0 %v27
  %190 = vmatpush.msra.mxu0 %v26
  %191 = vmatpush.msra.mxu0 %v25
  %192 = vmatpush.msra.mxu0 %v24
  %193 = vmatpush.msra.mxu0 %v23
  %194 = vmatpush.msra.mxu0 %v22
  %195 = vmatpush.msra.mxu0 %v21
  %196 = vmatpush.msra.mxu0 %v20
  %197 = vmatmul.f32.gmra.mxu0 %v180
  %v198 = vpop.f32.mrf.mxu0
  %v199 = vadd.f32 0.0, %v198
  %200 = vdwg.mxu0
  %s201 = scalar_lea.vmem %s2, 40
  %v202 = vld [vmem:[%s201] sm:$0xff]
  %v203 = vadd.f32 %v177, %v202
  %v204 = vsub.f32 %v199, %v177
  %v205 = vmul.f32 %v204, 0.2
  %v206 = vadd.f32 %v203, %v205
  %s207 = scalar_lea.vmem %s3, 40
  %208 = vst [vmem:[%s207] sm:$0xff] %v206
  %v209 = vtanh.pop %v206
  %210 = vmatpush.msra.mxu0 %v35
  %211 = vmatpush.msra.mxu0 %v34
  %212 = vmatpush.msra.mxu0 %v33
  %213 = vmatpush.msra.mxu0 %v32
  %214 = vmatpush.msra.mxu0 %v31
  %215 = vmatpush.msra.mxu0 %v30
  %216 = vmatpush.msra.mxu0 %v29
  %217 = vmatpush.msra.mxu0 %v28
  %218 = vmatpush.msra.mxu0 %v27
  %219 = vmatpush.msra.mxu0 %v26
  %220 = vmatpush.msra.mxu0 %v25
  %221 = vmatpush.msra.mxu0 %v24
  %222 = vmatpush.msra.mxu0 %v23
  %223 = vmatpush.msra.mxu0 %v22
  %224 = vmatpush.msra.mxu0 %v21
  %225 = vmatpush.msra.mxu0 %v20
  %226 = vmatmul.f32.gmra.mxu0 %v209
  %v227 = vpop.f32.mrf.mxu0
  %v228 = vadd.f32 0.0, %v227
  %229 = vdwg.mxu0
  %s230 = scalar_lea.vmem %s2, 48
  %v231 = vld [vmem:[%s230] sm:$0xff]
  %v232 = vadd.f32 %v206, %v231
  %v233 = vsub.f32 %v228, %v206
  %v234 = vmul.f32 %v233, 0.2
  %v235 = vadd.f32 %v232, %v234
  %s236 = scalar_lea.vmem %s3, 48
  %237 = vst [vmem:[%s236] sm:$0xff] %v235
  %v238 = vtanh.pop %v235
  %239 = vmatpush.msra.mxu0 %v35
  %240 = vmatpush.msra.mxu0 %v34
  %241 = vmatpush.msra.mxu0 %v33
  %242 = vmatpush.msra.mxu0 %v32
  %243 = vmatpush.msra.mxu0 %v31
  %244 = vmatpush.msra.mxu0 %v30
  %245 = vmatpush.msra.mxu0 %v29
  %246 = vmatpush.msra.mxu0 %v28
  %247 = vmatpush.msra.mxu0 %v27
  %248 = vmatpush.msra.mxu0 %v26
  %249 = vmatpush.msra.mxu0 %v25
  %250 = vmatpush.msra.mxu0 %v24
  %251 = vmatpush.msra.mxu0 %v23
  %252 = vmatpush.msra.mxu0 %v22
  %253 = vmatpush.msra.mxu0 %v21
  %254 = vmatpush.msra.mxu0 %v20
  %255 = vmatmul.f32.gmra.mxu0 %v238
  %v256 = vpop.f32.mrf.mxu0
  %v257 = vadd.f32 0.0, %v256
  %258 = vdwg.mxu0
  %s259 = scalar_lea.vmem %s2, 56
  %v260 = vld [vmem:[%s259] sm:$0xff]
  %v261 = vadd.f32 %v235, %v260
  %v262 = vsub.f32 %v257, %v235
  %v263 = vmul.f32 %v262, 0.2
  %v264 = vadd.f32 %v261, %v263
  %s265 = scalar_lea.vmem %s3, 56
  %266 = vst [vmem:[%s265] sm:$0xff] %v264
  %267 = vst [vmem:[#allocation2] sm:$0xff] %v264
  // Predicated region
  $region18: #{full_rank_rnn_forward.1} parent=0 // pred_check
    _
  $region19: #{full_rank_rnn_forward.1} parent=0 // pred_check_branch
    %269 = sbr.rel (0) target = $region21
  $region20: #{full_rank_rnn_forward.1} parent=0 // pred_region
    _
  $region21: #{full_rank_rnn_forward.1} parent=0 // pred_fallthru
    _
  // Predicated region
  $region22: #{full_rank_rnn_forward.1} parent=0 // pred_check
    _
  $region23: #{full_rank_rnn_forward.1} parent=0 // pred_check_branch
    %271 = sbr.rel (0) target = $region25
  $region24: #{full_rank_rnn_forward.1} parent=0 // pred_region
    _
  $region25: #{full_rank_rnn_forward.1} parent=0 // pred_fallthru
    _

</llo_original>
